<compile_context>
chip_gen: v6e
topology: v6e:2x2x1
jax: 0.10.0
libtpu: 0.0.40
codegen_flags: <defaults>
</compile_context>

<pallas_src>
import jax
import jax.numpy as jnp
from jax.experimental import pallas as pl
from jax.experimental.pallas import tpu as pltpu


def attention_kernel(enc_ref, va_ref, hb_ref, out_ref):
    tb, S, H = enc_ref.shape
    enc = enc_ref[...]                                           # (tb, S, H) native dtype
    va = jnp.broadcast_to(va_ref[...].astype(enc.dtype), (tb, 1, H))

    # scores[b, 0, s] = <v_a, enc[b, s, :]>  -- batched (1,H)x(H,S) on the MXU;
    # f32 lives only in the accumulator (no (tb,S,H) f32 temp in VMEM).
    scores = jnp.einsum('bqh,bsh->bqs', va, enc,
                        preferred_element_type=jnp.float32)      # (tb, 1, S) f32
    scores = scores + hb_ref[...]                                # + (hid @ v_b + c), (tb,1,1)

    # softmax over the sequence axis, f32 throughout
    m = jnp.max(scores, axis=-1, keepdims=True)
    e = jnp.exp(scores - m)
    denom = jnp.sum(e, axis=-1, keepdims=True)
    attn = e * pl.reciprocal(denom, approx=False)                # (tb, 1, S)

    # context[b, :] = sum_s attn[b, s] * enc[b, s, :] -- batched (1,S)x(S,H) MXU dot
    context = jnp.einsum('bqs,bsh->bqh', attn.astype(enc.dtype), enc,
                         preferred_element_type=jnp.float32)     # (tb, 1, H) f32
    out_ref[...] = context.reshape(tb, H).astype(out_ref.dtype)


def _pick_batch_tile(B, S, H, itemsize, budget_bytes):
    """Largest batch tile (multiple of 8) whose working set fits the VMEM budget,
    capped so the batch grid keeps >= 2 steps (v7x megacore)."""
    if B <= 8:
        return B
    # Per batch row: enc tile double-buffered + f32 working headroom + small vectors.
    per_row = S * H * (2 * itemsize + 4) + 4 * H * 4 + 64
    tb = (budget_bytes // max(per_row, 1)) // 8 * 8
    tb = max(8, int(tb))
    half = -(-B // 2)                 # ceil(B / 2)
    half = -(-half // 8) * 8          # round up to a sublane multiple
    tb = min(tb, half)                # keep >= 2 grid steps for v7x's 2 TCs
    tb = min(tb, -(-B // 8) * 8)      # never exceed B rounded up to 8
    return int(tb)


def attention_forward(hidden_state, encoder_outputs, params, *, batch_tile=None):
    """hidden_state: (B, H), encoder_outputs: (B, S, H) -> context (B, H)."""
    B, S, H = encoder_outputs.shape
    w1, b1, w2, b2, w3, b3, w4, b4, w5 = params

    # ---- host-side exact collapse of the activation-free linear chain ----
    f32 = jnp.float32
    w5t = w5.astype(f32).T                        # (H, 1)
    u4 = w4.astype(f32).T @ w5t                   # (H, 1)
    u3 = w3.astype(f32).T @ u4                    # (H, 1)
    u2 = w2.astype(f32).T @ u3                    # (H, 1)
    w1a = w1[:, :H].astype(f32)                   # encoder half of linear1
    w1b = w1[:, H:].astype(f32)                   # hidden  half of linear1
    v_a = (w1a.T @ u2).reshape(1, 1, H)           # (1, 1, H)
    v_b = (w1b.T @ u2)                            # (H, 1)
    c = (b1.astype(f32) @ u2 + b2.astype(f32) @ u3
         + b3.astype(f32) @ u4 + b4.astype(f32) @ w5t)            # (1,)
    # Fold the hidden-state term on the host: tiny (B,H)@(H,1) matvec.
    hid_bias = (hidden_state.astype(f32) @ v_b + c).reshape(B, 1, 1)

    # ---- VMEM-budgeted batch tiling ----
    itemsize = jnp.dtype(encoder_outputs.dtype).itemsize
    try:
        vmem_cap = int(pltpu.get_tpu_info().vmem_capacity_bytes)
    except Exception:
        vmem_cap = 64 << 20            # conservative fallback: v7x per-TC VMEM
    budget = min(int(vmem_cap * 0.6), 48 << 20)

    if batch_tile is None:
        batch_tile = _pick_batch_tile(B, S, H, itemsize, budget)
    tb = batch_tile
    grid = (pl.cdiv(B, tb),)
    # Note: when B % tb != 0, the padded tail rows compute softmax of unspecified
    # block contents; all ops are row-wise so valid rows are unaffected and the
    # out-of-range output rows are dropped.

    enc_tile_bytes = tb * S * H * itemsize
    vmem_limit = 2 * enc_tile_bytes + tb * S * H * 4 + (8 << 20)
    vmem_limit = int(min(max(vmem_limit, 32 << 20), vmem_cap - (8 << 20)))

    cost = pl.CostEstimate(
        flops=4 * B * S * H + 6 * B * S,
        transcendentals=B * S,
        bytes_accessed=(B * S * H + B * H) * itemsize + B * 4 + H * 4,
    )

    out = pl.pallas_call(
        attention_kernel,
        out_shape=jax.ShapeDtypeStruct((B, H), encoder_outputs.dtype),
        grid=grid,
        in_specs=[
            pl.BlockSpec((tb, S, H), lambda b: (b, 0, 0)),   # enc tile (streamed)
            pl.BlockSpec((1, 1, H), lambda b: (0, 0, 0)),    # v_a (pinned)
            pl.BlockSpec((tb, 1, 1), lambda b: (b, 0, 0)),   # folded hidden bias
        ],
        out_specs=pl.BlockSpec((tb, H), lambda b: (b, 0)),
        compiler_params=pltpu.CompilerParams(
            dimension_semantics=("parallel",),
            vmem_limit_bytes=vmem_limit),
        cost_estimate=cost,
    )(encoder_outputs, v_a, hid_bias)
    return out


def init_params(key, hidden_size):
    """Deterministic params mimicking nn.Linear shapes (uniform init)."""
    H = hidden_size
    ks = jax.random.split(key, 9)

    def lin(k, out_f, in_f, bias=True):
        bound = 1.0 / jnp.sqrt(in_f)
        w = jax.random.uniform(k, (out_f, in_f), jnp.float32, -bound, bound)
        if bias:
            b = jax.random.uniform(jax.random.fold_in(k, 1), (out_f,),
                                   jnp.float32, -bound, bound)
            return w, b
        return (w,)

    w1, b1 = lin(ks[0], H, 2 * H)
    w2, b2 = lin(ks[1], H, H)
    w3, b3 = lin(ks[2], H, H)
    w4, b4 = lin(ks[3], H, H)
    (w5,) = lin(ks[4], 1, H, bias=False)
    return (w1, b1, w2, b2, w3, b3, w4, b4, w5)


def reference_forward(hidden_state, encoder_outputs, params):
    """Pure-JAX layer-by-layer reference mirroring the PyTorch forward."""
    w1, b1, w2, b2, w3, b3, w4, b4, w5 = params
    B, S, H = encoder_outputs.shape
    hid = jnp.broadcast_to(hidden_state[:, None, :], (B, S, H))
    x = jnp.concatenate([encoder_outputs, hid], axis=-1).reshape(-1, 2 * H)
    x = x @ w1.T + b1
    x = x @ w2.T + b2
    x = x @ w3.T + b3
    x = x @ w4.T + b4
    scores = (x @ w5.T).reshape(B, S)
    attn = jax.nn.softmax(scores, axis=1)
    return jnp.einsum('bs,bsh->bh', attn, encoder_outputs)


if __name__ == "__main__":
    key = jax.random.PRNGKey(0)
    k_h, k_e, k_p = jax.random.split(key, 3)

    # Primary small test (matches the module's natural shapes).
    B, S, H = 2, 8, 32
    hidden_state = jax.random.normal(k_h, (B, H), jnp.float32)
    encoder_outputs = jax.random.normal(k_e, (B, S, H), jnp.float32)
    params = init_params(k_p, H)

    out = attention_forward(hidden_state, encoder_outputs, params)
    out = jax.block_until_ready(out)
    ref = reference_forward(hidden_state, encoder_outputs, params)
    assert out.shape == (B, H)
    assert jnp.allclose(out, ref, atol=1e-4, rtol=1e-4), "mismatch vs reference (B=2)"

    # Secondary test exercising the multi-step batch grid / tiling path.
    B2 = 16
    hs2 = jax.random.normal(jax.random.fold_in(k_h, 2), (B2, H), jnp.float32)
    enc2 = jax.random.normal(jax.random.fold_in(k_e, 2), (B2, S, H), jnp.float32)
    out2 = jax.block_until_ready(attention_forward(hs2, enc2, params))
    ref2 = reference_forward(hs2, enc2, params)
    assert jnp.allclose(out2, ref2, atol=1e-4, rtol=1e-4), "mismatch vs reference (B=16)"

    print("KERNEL_OK")
</pallas_src>

<mosaic_0001>
module attributes {stable_mosaic.version = 11 : i64} {
  func.func @attention_kernel(%arg0: i32, %arg1: memref<2x8x32xf32, #tpu.memory_space<vmem>>, %arg2: memref<1x1x32xf32, #tpu.memory_space<vmem>>, %arg3: memref<2x1x1xf32, #tpu.memory_space<vmem>>, %arg4: memref<2x32xf32, #tpu.memory_space<vmem>>) attributes {dimension_semantics = [#tpu.dimension_semantics<parallel>], iteration_bounds = array<i64: 1>, scalar_prefetch = 0 : i64, scratch_operands = 0 : i64, tpu.core_type = #tpu.core_type<tc>, window_params = [{transform_indices = @transform_0, window_bounds = array<i64: 2, 8, 32>}, {pipeline_mode = #tpu.pipeline_mode<synchronous>, transform_indices = @transform_1, window_bounds = array<i64: 1, 1, 32>}, {transform_indices = @transform_2, window_bounds = array<i64: 2, 1, 1>}, {transform_indices = @transform_3, window_bounds = array<i64: 2, 32>}]} {
    %c0 = arith.constant 0 : index
    %c0_0 = arith.constant 0 : index
    %c0_1 = arith.constant 0 : index
    %0 = vector.load %arg1[%c0, %c0_0, %c0_1] : memref<2x8x32xf32, #tpu.memory_space<vmem>>, vector<2x8x32xf32>
    %c0_2 = arith.constant 0 : index
    %c0_3 = arith.constant 0 : index
    %c0_4 = arith.constant 0 : index
    %1 = vector.load %arg2[%c0_2, %c0_3, %c0_4] : memref<1x1x32xf32, #tpu.memory_space<vmem>>, vector<1x1x32xf32>
    %2 = vector.shape_cast %1 : vector<1x1x32xf32> to vector<1x1x32xf32>
    %3 = vector.broadcast %2 : vector<1x1x32xf32> to vector<2x1x32xf32>
    "tpu.trace_start"() <{level = 10 : i32, message = "bqh,bsh->bqs"}> : () -> ()
    %cst = arith.constant dense<0.000000e+00> : vector<2x1x8xf32>
    %4 = tpu.matmul %3, %0, %cst {dimension_numbers = #tpu.dot_dimension_numbers<[2], [2], [1], [1], [0, 0, 0, 1, 1, 1], [0], [0]>} : vector<2x1x32xf32>, vector<2x8x32xf32>, vector<2x1x8xf32> -> vector<2x1x8xf32>
    "tpu.trace_stop"() : () -> ()
    %c0_5 = arith.constant 0 : index
    %c0_6 = arith.constant 0 : index
    %c0_7 = arith.constant 0 : index
    %5 = vector.load %arg3[%c0_5, %c0_6, %c0_7] : memref<2x1x1xf32, #tpu.memory_space<vmem>>, vector<2x1x1xf32>
    %6 = vector.broadcast %5 : vector<2x1x1xf32> to vector<2x1x8xf32>
    %7 = arith.addf %4, %6 : vector<2x1x8xf32>
    %cst_8 = arith.constant dense<0xFF800000> : vector<2x1xf32>
    %8 = vector.multi_reduction <maximumf>, %7, %cst_8 [2] : vector<2x1x8xf32> to vector<2x1xf32>
    %9 = vector.shape_cast %8 : vector<2x1xf32> to vector<2x1x1xf32>
    %10 = vector.broadcast %9 : vector<2x1x1xf32> to vector<2x1x8xf32>
    %11 = arith.subf %7, %10 : vector<2x1x8xf32>
    %12 = math.exp %11 : vector<2x1x8xf32>
    %cst_9 = arith.constant dense<0.000000e+00> : vector<2x1xf32>
    %13 = vector.multi_reduction <add>, %12, %cst_9 [2] : vector<2x1x8xf32> to vector<2x1xf32>
    %14 = vector.shape_cast %13 : vector<2x1xf32> to vector<2x1x1xf32>
    %15 = tpu.reciprocal %14 : vector<2x1x1xf32> -> vector<2x1x1xf32>
    %16 = vector.broadcast %15 : vector<2x1x1xf32> to vector<2x1x8xf32>
    %17 = arith.mulf %12, %16 : vector<2x1x8xf32>
    "tpu.trace_start"() <{level = 10 : i32, message = "bqs,bsh->bqh"}> : () -> ()
    %cst_10 = arith.constant dense<0.000000e+00> : vector<2x1x32xf32>
    %18 = tpu.matmul %17, %0, %cst_10 {dimension_numbers = #tpu.dot_dimension_numbers<[2], [1], [1], [2], [0, 0, 0, 1, 1, 2], [0], [0]>} : vector<2x1x8xf32>, vector<2x8x32xf32>, vector<2x1x32xf32> -> vector<2x1x32xf32>
    "tpu.trace_stop"() : () -> ()
    %19 = vector.shape_cast %18 : vector<2x1x32xf32> to vector<2x32xf32>
    %c0_11 = arith.constant 0 : index
    %c0_12 = arith.constant 0 : index
    %20 = vector.load %arg4[%c0_11, %c0_12] : memref<2x32xf32, #tpu.memory_space<vmem>>, vector<2x32xf32>
    tpu.vector_store %arg4[%c0_11, %c0_12], %19 {strides = array<i32>} : memref<2x32xf32, #tpu.memory_space<vmem>>, vector<2x32xf32>,
    return
  }
  func.func @transform_0(%arg0: i32) -> (i32, i32, i32) {
    %c0_i32 = arith.constant 0 : i32
    %c0_i32_0 = arith.constant 0 : i32
    %c0_i32_1 = arith.constant 0 : i32
    return %arg0, %c0_i32, %c0_i32_0 : i32, i32, i32
  }
  func.func @transform_1(%arg0: i32) -> (i32, i32, i32) {
    %c0_i32 = arith.constant 0 : i32
    %c0_i32_0 = arith.constant 0 : i32
    %c0_i32_1 = arith.constant 0 : i32
    %c0_i32_2 = arith.constant 0 : i32
    return %c0_i32, %c0_i32_0, %c0_i32_1 : i32, i32, i32
  }
  func.func @transform_2(%arg0: i32) -> (i32, i32, i32) {
    %c0_i32 = arith.constant 0 : i32
    %c0_i32_0 = arith.constant 0 : i32
    %c0_i32_1 = arith.constant 0 : i32
    return %arg0, %c0_i32, %c0_i32_0 : i32, i32, i32
  }
  func.func @transform_3(%arg0: i32) -> (i32, i32) {
    %c0_i32 = arith.constant 0 : i32
    %c0_i32_0 = arith.constant 0 : i32
    return %arg0, %c0_i32 : i32, i32
  }
}

</mosaic_0001>

<llo_original>
// kernel: tpu_custom_call.1
$region0: #{tpu_custom_call.1}
  #allocation0 [shape = 'u32[]', space=smem, size = 0x4, offset = 0x4, fixed_abs, tag = 'smem constant byte address 0x4 - core index']
  #allocation1 [shape = 'u32[144,128]{1,0:T(1,128)}', space=vmem, size = 0x12000, scoped, tag = 'internal scratch']
  %s0 = inlined_call_operand.hbm [shape: f32[2,8,32], index: 0, kind: input, shape index: {}]
  %s1 = inlined_call_operand.vmem [shape: f32[1,1,32], index: 1, kind: input, shape index: {}]
  %s2 = inlined_call_operand.vmem [shape: f32[2,1,1], index: 2, kind: input, shape index: {}]
  %s3 = inlined_call_operand.hbm [shape: f32[2,32], index: 3, kind: output, shape index: {}]
  %s4 = sld [smem:[#allocation0]]
  $region26: #{tpu_custom_call.1} parent=0
    _
  %s6 = ssub.s32 1, %s4
  %s7 = scalar_select 0, %s6, %s4
  $region1: #{tpu_custom_call.1} parent=0
    #allocation2 [shape = 'u8[8192]{0}', space=vmem, size = 0x2000, scoped, tag = 'input window, operand 0, single buffered']
    #allocation3 [shape = 's32[1]{0}', space=sflag, size = 0x4, scoped, tag = 'scoped memory for tpu_custom_call.1']
    #allocation4 [shape = 's32[1]{0}', space=sflag, size = 0x4, scoped, tag = 'scoped memory for tpu_custom_call.1']
    #allocation5 [shape = 'u8[1024]{0}', space=vmem, size = 0x400, scoped, tag = 'output window, operand 0, single buffered']
    %8 = vsyncpa [#allocation3], 0
    %9 = vsyncpa [#allocation4], 0
    // Predicated region
    $region2: #{tpu_custom_call.1} parent=1 // pred_check
      _
    $region3: #{tpu_custom_call.1} parent=1 // pred_check_branch
      %11 = sbr.rel (0) target = $region5
    $region4: #{tpu_custom_call.1} parent=1 // pred_region
      %s13 = ssub.s32 256, 256
      %14 = vsyncadd [#allocation3], %s13
      %s15 = sshll.u32 [#allocation2], 4
      %s16 = int_to_ptr.vmem [resolvable:$true] %s15
      %21 = dma.hbm_to_vmem [thread:$0]  %s0, 256, %s16, [#allocation3], 128, 128, 8
    $region5: #{tpu_custom_call.1} parent=1 // pred_fallthru
      _
    // Predicated region
    $region6: #{tpu_custom_call.1} parent=1 // pred_check
      _
    $region7: #{tpu_custom_call.1} parent=1 // pred_check_branch
      %23 = sbr.rel (0) target = $region9
    $region8: #{tpu_custom_call.1} parent=1 // pred_region
      _
    $region9: #{tpu_custom_call.1} parent=1 // pred_fallthru
      _
    // Predicated region
    $region10: #{tpu_custom_call.1} parent=1 // pred_check
      _
    $region11: #{tpu_custom_call.1} parent=1 // pred_check_branch
      %25 = sbr.rel (0) target = $region13
    $region12: #{tpu_custom_call.1} parent=1 // pred_region
      _
    $region13: #{tpu_custom_call.1} parent=1 // pred_fallthru
      _
    // Predicated region
    $region14: #{tpu_custom_call.1} parent=1 // pred_check
      _
    $region15: #{tpu_custom_call.1} parent=1 // pred_check_branch
      %27 = sbr.rel (0) target = $region17
    $region16: #{tpu_custom_call.1} parent=1 // pred_region
      %28 = dma.done [#allocation3], 256
    $region17: #{tpu_custom_call.1} parent=1 // pred_fallthru
      _
    %v29 = vld [vmem:[#allocation2] sm:$0xff]
    %v30 = vld [vmem:[#allocation2 + $0x8] sm:$0xff]
    %v31 = vld [vmem:[%s1] sm:$0x1]
    %v32 = vld [vmem:[%s2] sm:$0x1]
    %v33 = vld [vmem:[%s2 + $0x1] sm:$0x1]
    %35 = vset.pattern.permute.xlu0 0
    %36 = vperm.xlu0 %35, %v32
    %v37 = vpop.permute.xlu0 %36
    %v39 = vlaneseq
    %v40 = vshrl.u32 %v39, 7
    %v41 = vsub.s32 0, %v40
    %v42 = vrot.slane %v37, %v41
    %44 = vset.pattern.permute.xlu0 0
    %45 = vperm.xlu0 %44, %v33
    %v46 = vpop.permute.xlu0 %45
    %v48 = vlaneseq
    %v49 = vshrl.u32 %v48, 7
    %v50 = vsub.s32 0, %v49
    %v51 = vrot.slane %v46, %v50
    %vm52 = vcmask 261120
    %v54 = vsel %vm52, %v31, 0
    %v57 = vsel %vm52, %v29, 0
    %59 = vmatprep.subr.mxu0 0.0
    %60 = vmatpush1.xpose.msra.mxu0 0.0
    %61 = vmatprep.subr.mxu0 0.0
    %62 = vmatpush1.xpose.msra.mxu0 0.0
    %63 = vmatprep.subr.mxu0 0.0
    %64 = vmatpush1.xpose.msra.mxu0 0.0
    %65 = vmatprep.subr.mxu0 0.0
    %66 = vmatpush1.xpose.msra.mxu0 0.0
    %67 = vmatprep.subr.mxu0 0.0
    %68 = vmatpush1.xpose.msra.mxu0 0.0
    %69 = vmatprep.subr.mxu0 0.0
    %70 = vmatpush1.xpose.msra.mxu0 0.0
    %71 = vmatprep.subr.mxu0 0.0
    %72 = vmatpush1.xpose.msra.mxu0 0.0
    %73 = vmatprep.subr.mxu0 0.0
    %74 = vmatpush1.xpose.msra.mxu0 0.0
    %75 = vmatprep.subr.mxu0 0.0
    %76 = vmatpush1.xpose.msra.mxu0 0.0
    %77 = vmatprep.subr.mxu0 0.0
    %78 = vmatpush1.xpose.msra.mxu0 0.0
    %79 = vmatprep.subr.mxu0 0.0
    %80 = vmatpush1.xpose.msra.mxu0 0.0
    %81 = vmatprep.subr.mxu0 0.0
    %82 = vmatpush1.xpose.msra.mxu0 0.0
    %83 = vmatprep.subr.mxu0 0.0
    %84 = vmatpush1.xpose.msra.mxu0 0.0
    %85 = vmatprep.subr.mxu0 0.0
    %86 = vmatpush1.xpose.msra.mxu0 0.0
    %87 = vmatprep.subr.mxu0 0.0
    %88 = vmatpush1.xpose.msra.mxu0 0.0
    %89 = vmatprep.subr.mxu0 0.0
    %90 = vmatpush1.xpose.msra.mxu0 %v57
    %91 = vmatprep.subr.mxu0 0.0
    %92 = vmatpush2.xpose.msra.mxu0 0.0
    %93 = vmatprep.subr.mxu0 0.0
    %94 = vmatpush2.xpose.msra.mxu0 0.0
    %95 = vmatprep.subr.mxu0 0.0
    %96 = vmatpush2.xpose.msra.mxu0 0.0
    %97 = vmatprep.subr.mxu0 0.0
    %98 = vmatpush2.xpose.msra.mxu0 0.0
    %99 = vmatprep.subr.mxu0 0.0
    %100 = vmatpush2.xpose.msra.mxu0 0.0
    %101 = vmatprep.subr.mxu0 0.0
    %102 = vmatpush2.xpose.msra.mxu0 0.0
    %103 = vmatprep.subr.mxu0 0.0
    %104 = vmatpush2.xpose.msra.mxu0 0.0
    %105 = vmatprep.subr.mxu0 0.0
    %106 = vmatpush2.xpose.msra.mxu0 0.0
    %107 = vmatprep.subr.mxu0 0.0
    %108 = vmatpush2.xpose.msra.mxu0 0.0
    %109 = vmatprep.subr.mxu0 0.0
    %110 = vmatpush2.xpose.msra.mxu0 0.0
    %111 = vmatprep.subr.mxu0 0.0
    %112 = vmatpush2.xpose.msra.mxu0 0.0
    %113 = vmatprep.subr.mxu0 0.0
    %114 = vmatpush2.xpose.msra.mxu0 0.0
    %115 = vmatprep.subr.mxu0 0.0
    %116 = vmatpush2.xpose.msra.mxu0 0.0
    %117 = vmatprep.subr.mxu0 0.0
    %118 = vmatpush2.xpose.msra.mxu0 0.0
    %119 = vmatprep.subr.mxu0 0.0
    %120 = vmatpush2.xpose.msra.mxu0 0.0
    %121 = vmatprep.subr.mxu0 0.0
    %122 = vmatpush2.xpose.msra.mxu0 0.0
    %123 = vmatprep.mubr.f32.mxu0 0.0
    %124 = vmatmul.mubr.f32.gmra.mxu0 %v54
    %v125 = vpop.f32.mrf.mxu0
    %v126 = vadd.f32 %v42, %v125
    %v127 = vpop.f32.mrf.mxu0
    %128 = vdwg.mxu0
    %v130 = vsel %vm52, %v30, 0
    %132 = vmatprep.subr.mxu0 0.0
    %133 = vmatpush1.xpose.msra.mxu0 0.0
    %134 = vmatprep.subr.mxu0 0.0
    %135 = vmatpush1.xpose.msra.mxu0 0.0
    %136 = vmatprep.subr.mxu0 0.0
    %137 = vmatpush1.xpose.msra.mxu0 0.0
    %138 = vmatprep.subr.mxu0 0.0
    %139 = vmatpush1.xpose.msra.mxu0 0.0
    %140 = vmatprep.subr.mxu0 0.0
    %141 = vmatpush1.xpose.msra.mxu0 0.0
    %142 = vmatprep.subr.mxu0 0.0
    %143 = vmatpush1.xpose.msra.mxu0 0.0
    %144 = vmatprep.subr.mxu0 0.0
    %145 = vmatpush1.xpose.msra.mxu0 0.0
    %146 = vmatprep.subr.mxu0 0.0
    %147 = vmatpush1.xpose.msra.mxu0 0.0
    %148 = vmatprep.subr.mxu0 0.0
    %149 = vmatpush1.xpose.msra.mxu0 0.0
    %150 = vmatprep.subr.mxu0 0.0
    %151 = vmatpush1.xpose.msra.mxu0 0.0
    %152 = vmatprep.subr.mxu0 0.0
    %153 = vmatpush1.xpose.msra.mxu0 0.0
    %154 = vmatprep.subr.mxu0 0.0
    %155 = vmatpush1.xpose.msra.mxu0 0.0
    %156 = vmatprep.subr.mxu0 0.0
    %157 = vmatpush1.xpose.msra.mxu0 0.0
    %158 = vmatprep.subr.mxu0 0.0
    %159 = vmatpush1.xpose.msra.mxu0 0.0
    %160 = vmatprep.subr.mxu0 0.0
    %161 = vmatpush1.xpose.msra.mxu0 0.0
    %162 = vmatprep.subr.mxu0 0.0
    %163 = vmatpush1.xpose.msra.mxu0 %v130
    %164 = vmatprep.subr.mxu0 0.0
    %165 = vmatpush2.xpose.msra.mxu0 0.0
    %166 = vmatprep.subr.mxu0 0.0
    %167 = vmatpush2.xpose.msra.mxu0 0.0
    %168 = vmatprep.subr.mxu0 0.0
    %169 = vmatpush2.xpose.msra.mxu0 0.0
    %170 = vmatprep.subr.mxu0 0.0
    %171 = vmatpush2.xpose.msra.mxu0 0.0
    %172 = vmatprep.subr.mxu0 0.0
    %173 = vmatpush2.xpose.msra.mxu0 0.0
    %174 = vmatprep.subr.mxu0 0.0
    %175 = vmatpush2.xpose.msra.mxu0 0.0
    %176 = vmatprep.subr.mxu0 0.0
    %177 = vmatpush2.xpose.msra.mxu0 0.0
    %178 = vmatprep.subr.mxu0 0.0
    %179 = vmatpush2.xpose.msra.mxu0 0.0
    %180 = vmatprep.subr.mxu0 0.0
    %181 = vmatpush2.xpose.msra.mxu0 0.0
    %182 = vmatprep.subr.mxu0 0.0
    %183 = vmatpush2.xpose.msra.mxu0 0.0
    %184 = vmatprep.subr.mxu0 0.0
    %185 = vmatpush2.xpose.msra.mxu0 0.0
    %186 = vmatprep.subr.mxu0 0.0
    %187 = vmatpush2.xpose.msra.mxu0 0.0
    %188 = vmatprep.subr.mxu0 0.0
    %189 = vmatpush2.xpose.msra.mxu0 0.0
    %190 = vmatprep.subr.mxu0 0.0
    %191 = vmatpush2.xpose.msra.mxu0 0.0
    %192 = vmatprep.subr.mxu0 0.0
    %193 = vmatpush2.xpose.msra.mxu0 0.0
    %194 = vmatprep.subr.mxu0 0.0
    %195 = vmatpush2.xpose.msra.mxu0 0.0
    %196 = vmatprep.mubr.f32.mxu0 0.0
    %197 = vmatmul.mubr.f32.gmra.mxu0 %v54
    %v198 = vpop.f32.mrf.mxu0
    %v199 = vadd.f32 %v51, %v198
    %v200 = vpop.f32.mrf.mxu0
    %201 = vdwg.mxu0
    %vm202 = vcmask 57344
    %v203 = vsel %vm202, %v126, -inf
    %204 = vmax.xlane.f32.xlu0 %v203
    %v205 = vpop.xlane.xlu0 %204
    %v206 = vsel %vm202, %v199, -inf
    %207 = vmax.xlane.f32.xlu0 %v206
    %v208 = vpop.xlane.xlu0 %207
    %v209 = vsub.f32 %v126, %v205
    %v210 = vsub.f32 %v199, %v208
    %v211 = vmul.f32 %v209, 1.442695
    %v212 = vpow.pop %v211
    %v213 = vmul.f32 %v210, 1.442695
    %v214 = vpow.pop %v213
    %v215 = vsel %vm202, %v212, 0.0
    %216 = vadd.xlane.f32.xlu0 %v215
    %v217 = vpop.xlane.xlu0 %216
    %v218 = vsel %vm202, %v214, 0.0
    %219 = vadd.xlane.f32.xlu0 %v218
    %v220 = vpop.xlane.xlu0 %219
    %v221 = vrcp.pop %v217
    %v222 = vrcp.pop %v220
    %v223 = vmul.f32 %v212, %v221
    %v224 = vmul.f32 %v214, %v222
    %vm225 = vcmask 64512
    %v227 = vsel %vm225, %v223, 0
    %229 = vmatprep.subr.mxu0 0.0
    %230 = vmatpush1.msra.mxu0 0.0
    %231 = vmatprep.subr.mxu0 0.0
    %232 = vmatpush1.msra.mxu0 0.0
    %233 = vmatprep.subr.mxu0 0.0
    %234 = vmatpush1.msra.mxu0 0.0
    %235 = vmatprep.subr.mxu0 0.0
    %236 = vmatpush1.msra.mxu0 0.0
    %237 = vmatprep.subr.mxu0 0.0
    %238 = vmatpush1.msra.mxu0 0.0
    %239 = vmatprep.subr.mxu0 0.0
    %240 = vmatpush1.msra.mxu0 0.0
    %241 = vmatprep.subr.mxu0 0.0
    %242 = vmatpush1.msra.mxu0 0.0
    %243 = vmatprep.subr.mxu0 0.0
    %244 = vmatpush1.msra.mxu0 0.0
    %245 = vmatprep.subr.mxu0 0.0
    %246 = vmatpush1.msra.mxu0 0.0
    %247 = vmatprep.subr.mxu0 0.0
    %248 = vmatpush1.msra.mxu0 0.0
    %249 = vmatprep.subr.mxu0 0.0
    %250 = vmatpush1.msra.mxu0 0.0
    %251 = vmatprep.subr.mxu0 0.0
    %252 = vmatpush1.msra.mxu0 0.0
    %253 = vmatprep.subr.mxu0 0.0
    %254 = vmatpush1.msra.mxu0 0.0
    %255 = vmatprep.subr.mxu0 0.0
    %256 = vmatpush1.msra.mxu0 0.0
    %257 = vmatprep.subr.mxu0 0.0
    %258 = vmatpush1.msra.mxu0 0.0
    %259 = vmatprep.subr.mxu0 0.0
    %260 = vmatpush1.msra.mxu0 %v29
    %261 = vmatprep.subr.mxu0 0.0
    %262 = vmatpush2.msra.mxu0 0.0
    %263 = vmatprep.subr.mxu0 0.0
    %264 = vmatpush2.msra.mxu0 0.0
    %265 = vmatprep.subr.mxu0 0.0
    %266 = vmatpush2.msra.mxu0 0.0
    %267 = vmatprep.subr.mxu0 0.0
    %268 = vmatpush2.msra.mxu0 0.0
    %269 = vmatprep.subr.mxu0 0.0
    %270 = vmatpush2.msra.mxu0 0.0
    %271 = vmatprep.subr.mxu0 0.0
    %272 = vmatpush2.msra.mxu0 0.0
    %273 = vmatprep.subr.mxu0 0.0
    %274 = vmatpush2.msra.mxu0 0.0
    %275 = vmatprep.subr.mxu0 0.0
    %276 = vmatpush2.msra.mxu0 0.0
    %277 = vmatprep.subr.mxu0 0.0
    %278 = vmatpush2.msra.mxu0 0.0
    %279 = vmatprep.subr.mxu0 0.0
    %280 = vmatpush2.msra.mxu0 0.0
    %281 = vmatprep.subr.mxu0 0.0
    %282 = vmatpush2.msra.mxu0 0.0
    %283 = vmatprep.subr.mxu0 0.0
    %284 = vmatpush2.msra.mxu0 0.0
    %285 = vmatprep.subr.mxu0 0.0
    %286 = vmatpush2.msra.mxu0 0.0
    %287 = vmatprep.subr.mxu0 0.0
    %288 = vmatpush2.msra.mxu0 0.0
    %289 = vmatprep.subr.mxu0 0.0
    %290 = vmatpush2.msra.mxu0 0.0
    %291 = vmatprep.subr.mxu0 0.0
    %292 = vmatpush2.msra.mxu0 0.0
    %293 = vmatprep.mubr.f32.mxu0 0.0
    %294 = vmatmul.mubr.f32.gmra.mxu0 %v227
    %v295 = vpop.f32.mrf.mxu0
    %v296 = vadd.f32 0.0, %v295
    %v297 = vpop.f32.mrf.mxu0
    %298 = vdwg.mxu0
    %v300 = vsel %vm225, %v224, 0
    %302 = vmatprep.subr.mxu0 0.0
    %303 = vmatpush1.msra.mxu0 0.0
    %304 = vmatprep.subr.mxu0 0.0
    %305 = vmatpush1.msra.mxu0 0.0
    %306 = vmatprep.subr.mxu0 0.0
    %307 = vmatpush1.msra.mxu0 0.0
    %308 = vmatprep.subr.mxu0 0.0
    %309 = vmatpush1.msra.mxu0 0.0
    %310 = vmatprep.subr.mxu0 0.0
    %311 = vmatpush1.msra.mxu0 0.0
    %312 = vmatprep.subr.mxu0 0.0
    %313 = vmatpush1.msra.mxu0 0.0
    %314 = vmatprep.subr.mxu0 0.0
    %315 = vmatpush1.msra.mxu0 0.0
    %316 = vmatprep.subr.mxu0 0.0
    %317 = vmatpush1.msra.mxu0 0.0
    %318 = vmatprep.subr.mxu0 0.0
    %319 = vmatpush1.msra.mxu0 0.0
    %320 = vmatprep.subr.mxu0 0.0
    %321 = vmatpush1.msra.mxu0 0.0
    %322 = vmatprep.subr.mxu0 0.0
    %323 = vmatpush1.msra.mxu0 0.0
    %324 = vmatprep.subr.mxu0 0.0
    %325 = vmatpush1.msra.mxu0 0.0
    %326 = vmatprep.subr.mxu0 0.0
    %327 = vmatpush1.msra.mxu0 0.0
    %328 = vmatprep.subr.mxu0 0.0
    %329 = vmatpush1.msra.mxu0 0.0
    %330 = vmatprep.subr.mxu0 0.0
    %331 = vmatpush1.msra.mxu0 0.0
    %332 = vmatprep.subr.mxu0 0.0
    %333 = vmatpush1.msra.mxu0 %v30
    %334 = vmatprep.subr.mxu0 0.0
    %335 = vmatpush2.msra.mxu0 0.0
    %336 = vmatprep.subr.mxu0 0.0
    %337 = vmatpush2.msra.mxu0 0.0
    %338 = vmatprep.subr.mxu0 0.0
    %339 = vmatpush2.msra.mxu0 0.0
    %340 = vmatprep.subr.mxu0 0.0
    %341 = vmatpush2.msra.mxu0 0.0
    %342 = vmatprep.subr.mxu0 0.0
    %343 = vmatpush2.msra.mxu0 0.0
    %344 = vmatprep.subr.mxu0 0.0
    %345 = vmatpush2.msra.mxu0 0.0
    %346 = vmatprep.subr.mxu0 0.0
    %347 = vmatpush2.msra.mxu0 0.0
    %348 = vmatprep.subr.mxu0 0.0
    %349 = vmatpush2.msra.mxu0 0.0
    %350 = vmatprep.subr.mxu0 0.0
    %351 = vmatpush2.msra.mxu0 0.0
    %352 = vmatprep.subr.mxu0 0.0
    %353 = vmatpush2.msra.mxu0 0.0
    %354 = vmatprep.subr.mxu0 0.0
    %355 = vmatpush2.msra.mxu0 0.0
    %356 = vmatprep.subr.mxu0 0.0
    %357 = vmatpush2.msra.mxu0 0.0
    %358 = vmatprep.subr.mxu0 0.0
    %359 = vmatpush2.msra.mxu0 0.0
    %360 = vmatprep.subr.mxu0 0.0
    %361 = vmatpush2.msra.mxu0 0.0
    %362 = vmatprep.subr.mxu0 0.0
    %363 = vmatpush2.msra.mxu0 0.0
    %364 = vmatprep.subr.mxu0 0.0
    %365 = vmatpush2.msra.mxu0 0.0
    %366 = vmatprep.mubr.f32.mxu0 0.0
    %367 = vmatmul.mubr.f32.gmra.mxu0 %v300
    %v368 = vpop.f32.mrf.mxu0
    %v369 = vadd.f32 0.0, %v368
    %v370 = vpop.f32.mrf.mxu0
    %371 = vdwg.mxu0
    %v374 = vrot.slane %v369, 7
    %vm375 = vcmask 1041409
    %v376 = vsel %vm375, %v374, %v296
    %vm378 = vcmask 254976
    %379 = vst.msk [vmem:[#allocation5] sm:$0x3] %vm378, %v376
    // Predicated region
    $region18: #{tpu_custom_call.1} parent=1 // pred_check
      _
    $region19: #{tpu_custom_call.1} parent=1 // pred_check_branch
      %381 = sbr.rel (0) target = $region21
    $region20: #{tpu_custom_call.1} parent=1 // pred_region
      %s383 = ssub.s32 32, 32
      %384 = vsyncadd [#allocation4], %s383
      %s386 = sshll.u32 [#allocation5], 4
      %s387 = int_to_ptr.vmem [resolvable:$true] %s386
      %389 = dma.vmem_to_hbm [thread:$0]  %s387, 32, %s3, [#allocation4]
    $region21: #{tpu_custom_call.1} parent=1 // pred_fallthru
      _
    // Predicated region
    $region22: #{tpu_custom_call.1} parent=1 // pred_check
      _
    $region23: #{tpu_custom_call.1} parent=1 // pred_check_branch
      %391 = sbr.rel (0) target = $region25
    $region24: #{tpu_custom_call.1} parent=1 // pred_region
      %392 = dma.done [#allocation4], 32
    $region25: #{tpu_custom_call.1} parent=1 // pred_fallthru
      _
    %393 = vsyncpa [#allocation3], 1
    %394 = vsyncpa [#allocation4], 1

</llo_original>
